<compile_context>
chip_gen: v7x
topology: tpu7x:2x2x1
jax: 0.10.0
libtpu: 0.0.40
codegen_flags: <defaults>
</compile_context>

<pallas_src>
import jax
import jax.numpy as jnp
import numpy as np
from jax.experimental import pallas as pl
from jax.experimental.pallas import tpu as pltpu


def channel_attention_kernel(x_ref, w1_ref, w2_ref, o_ref, p_ref):
    # x_ref : (Bt, C, HW)  Bt batch slabs, native dtype
    # w1_ref: (Cr, C)      first 1x1 conv weight (PyTorch layout, bias-free)
    # w2_ref: (C, Cr)      second 1x1 conv weight (PyTorch layout, bias-free)
    # o_ref : (1, C, Bt)   sigmoid gate columns for this block of batches
    # p_ref : (C, 2*Bt)    f32 scratch: lanes = [avg_0..avg_{Bt-1}, max_0..max_{Bt-1}]
    bt = x_ref.shape[0]
    hw = x_ref.shape[2]
    inv_hw = 1.0 / hw

    # --- squeeze: global avg + max pool over the spatial (lane) axis ----------
    # Statically unrolled over the (small) Bt batches in this block; the pooling
    # work is fully hidden under the streaming x DMA. Sum accumulates in f32
    # (no-op cast for f32 inputs); max is exact in the native dtype.
    for b in range(bt):
        xb = x_ref[b]                                                    # (C, HW)
        p_ref[:, b:b + 1] = (
            jnp.sum(xb.astype(jnp.float32), axis=-1, keepdims=True) * inv_hw)
        p_ref[:, bt + b:bt + b + 1] = (
            jnp.max(xb, axis=-1, keepdims=True).astype(jnp.float32))

    # --- excite: shared bias-free MLP, fused over the {avg, max} x Bt columns --
    p = p_ref[...]                                                       # (C, 2*Bt)
    w1 = w1_ref[...].astype(jnp.float32)                                 # (Cr, C)
    w2 = w2_ref[...].astype(jnp.float32)                                 # (C, Cr)
    h = jnp.maximum(jnp.dot(w1, p, preferred_element_type=jnp.float32), 0.0)   # (Cr, 2*Bt)
    g = jnp.dot(w2, h, preferred_element_type=jnp.float32)               # (C, 2*Bt)
    gate = jax.nn.sigmoid(g[:, :bt] + g[:, bt:])                         # (C, Bt)
    o_ref[...] = gate[None].astype(o_ref.dtype)                          # (1, C, Bt)


def _pick_block_batches(B, C, HW, itemsize):
    """Choose how many batches to pool per grid step + an explicit VMEM limit."""
    hw_pad = pl.cdiv(HW, 128) * 128          # lane padding of the x block
    c_pad = pl.cdiv(C, 8) * 8                # sublane padding
    eff_item = max(4, itemsize)              # headroom for the f32 cast of sub-f32 x
    per_batch = c_pad * hw_pad * eff_item

    try:                                     # generation-aware budgets
        vmem_cap = int(pltpu.get_tpu_info().vmem_capacity_bytes)
    except Exception:
        vmem_cap = 64 << 20                  # conservative fallback: v7x physical VMEM
    if vmem_cap >= (100 << 20):              # v5e / v6e: 128 MiB physical
        target_block, two_buf_budget = 16 << 20, 64 << 20
    else:                                    # v7x: 64 MiB physical (32 MiB scoped default)
        target_block, two_buf_budget = 4 << 20, 24 << 20

    bt = int(max(1, min(B, target_block // per_batch, 64)))  # 64 bounds the unrolled pool loop
    while bt > 1 and 2 * bt * per_batch > two_buf_budget:
        bt //= 2
    if B > 1 and pl.cdiv(B, bt) < 2:         # keep >= 2 grid steps for v7x's 2 TensorCores
        bt = pl.cdiv(B, 2)

    vmem_limit = 2 * bt * per_batch + (8 << 20)   # x double buffers + weights/out/scratch
    vmem_limit = int(max(16 << 20, min(vmem_limit, (vmem_cap * 3) // 4)))
    return bt, vmem_limit


def channel_attention(x_nchw, w1, w2):
    """x_nchw: (B, C, H, W). Weights follow the PyTorch 1x1-conv convention with
    the trailing 1x1 squeezed: w1 (C//r, C), w2 (C, C//r). Returns the sigmoid
    gate with shape (B, C, 1, 1)."""
    B, C, H, W = x_nchw.shape
    HW = H * W
    Cr = w1.shape[0]
    x3 = x_nchw.reshape(B, C, HW)            # free view of contiguous NCHW

    bt, vmem_limit = _pick_block_batches(B, C, HW, x_nchw.dtype.itemsize)
    nb = pl.cdiv(B, bt)                      # last block may overhang; its tail
                                             # columns are sliced off below.

    cost = pl.CostEstimate(
        flops=int(2 * B * C * HW + 8 * B * Cr * C),       # pools + fused 2-layer MLP
        transcendentals=int(B * C),                        # sigmoid
        bytes_accessed=int(x3.size * x3.dtype.itemsize + B * C * x3.dtype.itemsize
                           + w1.size * w1.dtype.itemsize + w2.size * w2.dtype.itemsize),
    )

    gate_cols = pl.pallas_call(
        channel_attention_kernel,
        out_shape=jax.ShapeDtypeStruct((nb, C, bt), x_nchw.dtype),
        grid=(nb,),
        in_specs=[
            pl.BlockSpec((bt, C, HW), lambda i: (i, 0, 0)),   # streamed x blocks (default double-buffered)
            pl.BlockSpec((Cr, C), lambda i: (0, 0)),          # resident weights
            pl.BlockSpec((C, Cr), lambda i: (0, 0)),
        ],
        out_specs=pl.BlockSpec((1, C, bt), lambda i: (i, 0, 0)),
        scratch_shapes=[pltpu.VMEM((C, 2 * bt), jnp.float32)],
        compiler_params=pltpu.CompilerParams(
            dimension_semantics=("parallel",),
            vmem_limit_bytes=vmem_limit,
        ),
        cost_estimate=cost,
    )(x3, w1, w2)

    # (nb, C, bt) gate columns -> (B, C) rows; tiny relayout handled by XLA.
    gate = jnp.moveaxis(gate_cols, 1, 2).reshape(nb * bt, C)[:B]
    return gate.reshape(B, C, 1, 1)


def channel_attention_ref(x, w1, w2):
    """Pure-JAX reference mirroring the PyTorch module."""
    avg = jnp.mean(x, axis=(2, 3))                  # (B, C)
    mxp = jnp.max(x, axis=(2, 3))                   # (B, C)

    def fc(p):
        h = jnp.maximum(p @ w1.T, 0.0)              # (B, Cr)
        return h @ w2.T                             # (B, C)

    return jax.nn.sigmoid(fc(avg) + fc(mxp))[:, :, None, None]


if __name__ == "__main__":
    # small shapes consistent with the module (ratio=16 => C must be >= 16)
    B, C, H, W = 2, 64, 16, 16
    ratio = 16
    Cr = C // ratio

    key = jax.random.PRNGKey(0)
    kx, k1, k2 = jax.random.split(key, 3)

    x = jax.random.normal(kx, (B, C, H, W), dtype=jnp.float32)
    # deterministic synthetic params (PyTorch 1x1-conv weights, no bias)
    w1 = jax.random.normal(k1, (Cr, C), dtype=jnp.float32) * 0.1
    w2 = jax.random.normal(k2, (C, Cr), dtype=jnp.float32) * 0.1

    out = jax.block_until_ready(channel_attention(x, w1, w2))
    ref = jax.block_until_ready(channel_attention_ref(x, w1, w2))
    np.testing.assert_allclose(np.asarray(out), np.asarray(ref),
                               rtol=1e-5, atol=1e-5)

    print("KERNEL_OK")
</pallas_src>

<mosaic_0001>
module attributes {stable_mosaic.version = 11 : i64} {
  func.func @channel_attention_kernel(%arg0: i32, %arg1: memref<1x64x256xf32, #tpu.memory_space<vmem>>, %arg2: memref<4x64xf32, #tpu.memory_space<vmem>>, %arg3: memref<64x4xf32, #tpu.memory_space<vmem>>, %arg4: memref<1x64x1xf32, #tpu.memory_space<vmem>>, %arg5: memref<64x2xf32, #tpu.memory_space<vmem>>) attributes {dimension_semantics = [#tpu.dimension_semantics<parallel>], iteration_bounds = array<i64: 2>, scalar_prefetch = 0 : i64, scratch_operands = 1 : i64, tpu.core_type = #tpu.core_type<tc>, window_params = [{transform_indices = @transform_0, window_bounds = array<i64: 1, 64, 256>}, {pipeline_mode = #tpu.pipeline_mode<synchronous>, transform_indices = @transform_1, window_bounds = array<i64: 4, 64>}, {pipeline_mode = #tpu.pipeline_mode<synchronous>, transform_indices = @transform_2, window_bounds = array<i64: 64, 4>}, {transform_indices = @transform_3, window_bounds = array<i64: 1, 64, 1>}]} {
    %c0 = arith.constant 0 : index
    %c0_0 = arith.constant 0 : index
    %c0_1 = arith.constant 0 : index
    %0 = vector.load %arg1[%c0, %c0_0, %c0_1] : memref<1x64x256xf32, #tpu.memory_space<vmem>>, vector<1x64x256xf32>
    %1 = vector.shape_cast %0 : vector<1x64x256xf32> to vector<64x256xf32>
    %cst = arith.constant dense<0.000000e+00> : vector<64xf32>
    %2 = vector.multi_reduction <add>, %1, %cst [1] : vector<64x256xf32> to vector<64xf32>
    %3 = vector.shape_cast %2 : vector<64xf32> to vector<64x1xf32>
    %cst_2 = arith.constant 3.906250e-03 : f32
    %4 = vector.broadcast %cst_2 : f32 to vector<64x1xf32>
    %5 = arith.mulf %3, %4 : vector<64x1xf32>
    %c0_3 = arith.constant 0 : index
    %c0_4 = arith.constant 0 : index
    %6 = vector.load %arg5[%c0_3, %c0_4] : memref<64x2xf32, #tpu.memory_space<vmem>>, vector<64x1xf32>
    tpu.vector_store %arg5[%c0_3, %c0_4], %5 {strides = array<i32>} : memref<64x2xf32, #tpu.memory_space<vmem>>, vector<64x1xf32>,
    %cst_5 = arith.constant dense<0xFF800000> : vector<64xf32>
    %7 = vector.multi_reduction <maximumf>, %1, %cst_5 [1] : vector<64x256xf32> to vector<64xf32>
    %8 = vector.shape_cast %7 : vector<64xf32> to vector<64x1xf32>
    %c0_6 = arith.constant 0 : index
    %c1 = arith.constant 1 : index
    %9 = vector.load %arg5[%c0_6, %c1] : memref<64x2xf32, #tpu.memory_space<vmem>>, vector<64x1xf32>
    tpu.vector_store %arg5[%c0_6, %c1], %8 {strides = array<i32>} : memref<64x2xf32, #tpu.memory_space<vmem>>, vector<64x1xf32>,
    %c0_7 = arith.constant 0 : index
    %c0_8 = arith.constant 0 : index
    %10 = vector.load %arg5[%c0_7, %c0_8] : memref<64x2xf32, #tpu.memory_space<vmem>>, vector<64x2xf32>
    %c0_9 = arith.constant 0 : index
    %c0_10 = arith.constant 0 : index
    %11 = vector.load %arg2[%c0_9, %c0_10] : memref<4x64xf32, #tpu.memory_space<vmem>>, vector<4x64xf32>
    %c0_11 = arith.constant 0 : index
    %c0_12 = arith.constant 0 : index
    %12 = vector.load %arg3[%c0_11, %c0_12] : memref<64x4xf32, #tpu.memory_space<vmem>>, vector<64x4xf32>
    %cst_13 = arith.constant dense<0.000000e+00> : vector<4x2xf32>
    %13 = tpu.matmul %11, %10, %cst_13 {dimension_numbers = #tpu.dot_dimension_numbers<[1], [0], [0], [1], [0, 0, 1, 1], [], []>} : vector<4x64xf32>, vector<64x2xf32>, vector<4x2xf32> -> vector<4x2xf32>
    %cst_14 = arith.constant 0.000000e+00 : f32
    %14 = vector.broadcast %cst_14 : f32 to vector<4x2xf32>
    %15 = arith.maximumf %13, %14 : vector<4x2xf32>
    %cst_15 = arith.constant dense<0.000000e+00> : vector<64x2xf32>
    %16 = tpu.matmul %12, %15, %cst_15 {dimension_numbers = #tpu.dot_dimension_numbers<[1], [0], [0], [1], [0, 0, 1, 1], [], []>} : vector<64x4xf32>, vector<4x2xf32>, vector<64x2xf32> -> vector<64x2xf32>
    %17 = vector.extract_strided_slice %16 {offsets = [0, 0], sizes = [64, 1], strides = [1, 1]} : vector<64x2xf32> to vector<64x1xf32>
    %18 = vector.extract_strided_slice %16 {offsets = [0, 1], sizes = [64, 1], strides = [1, 1]} : vector<64x2xf32> to vector<64x1xf32>
    %19 = arith.addf %17, %18 : vector<64x1xf32>
    %20 = arith.negf %19 : vector<64x1xf32>
    %21 = math.exp %20 : vector<64x1xf32>
    %cst_16 = arith.constant 1.000000e+00 : f32
    %22 = vector.broadcast %cst_16 : f32 to vector<64x1xf32>
    %23 = arith.addf %22, %21 : vector<64x1xf32>
    %24 = arith.divf %22, %23 : vector<64x1xf32>
    %25 = vector.shape_cast %24 : vector<64x1xf32> to vector<1x64x1xf32>
    %c0_17 = arith.constant 0 : index
    %c0_18 = arith.constant 0 : index
    %c0_19 = arith.constant 0 : index
    %26 = vector.load %arg4[%c0_17, %c0_18, %c0_19] : memref<1x64x1xf32, #tpu.memory_space<vmem>>, vector<1x64x1xf32>
    tpu.vector_store %arg4[%c0_17, %c0_18, %c0_19], %25 {strides = array<i32>} : memref<1x64x1xf32, #tpu.memory_space<vmem>>, vector<1x64x1xf32>,
    return
  }
  func.func @transform_0(%arg0: i32) -> (i32, i32, i32) {
    %c0_i32 = arith.constant 0 : i32
    %c0_i32_0 = arith.constant 0 : i32
    %c0_i32_1 = arith.constant 0 : i32
    return %arg0, %c0_i32, %c0_i32_0 : i32, i32, i32
  }
  func.func @transform_1(%arg0: i32) -> (i32, i32) {
    %c0_i32 = arith.constant 0 : i32
    %c0_i32_0 = arith.constant 0 : i32
    %c0_i32_1 = arith.constant 0 : i32
    return %c0_i32, %c0_i32_0 : i32, i32
  }
  func.func @transform_2(%arg0: i32) -> (i32, i32) {
    %c0_i32 = arith.constant 0 : i32
    %c0_i32_0 = arith.constant 0 : i32
    %c0_i32_1 = arith.constant 0 : i32
    return %c0_i32, %c0_i32_0 : i32, i32
  }
  func.func @transform_3(%arg0: i32) -> (i32, i32, i32) {
    %c0_i32 = arith.constant 0 : i32
    %c0_i32_0 = arith.constant 0 : i32
    %c0_i32_1 = arith.constant 0 : i32
    return %arg0, %c0_i32, %c0_i32_0 : i32, i32, i32
  }
}

</mosaic_0001>

<llo_original>
// kernel: tpu_custom_call.1
$region0: #{tpu_custom_call.1}
  #allocation0 [shape = 'u32[]', space=smem, size = 0x4, offset = 0x4, fixed_abs, tag = 'smem constant byte address 0x4 - core index']
  #allocation1 [shape = 'u32[144,128]{1,0:T(1,128)}', space=vmem, size = 0x12000, scoped, tag = 'internal scratch']
  #allocation2 [shape = 'f32[64,2]{1,0:T(8,128)}', space=vmem, size = 0x8000, scoped, tag = 'scratch operand']
  %s0 = inlined_call_operand.hbm [shape: f32[2,64,256], index: 0, kind: input, shape index: {}]
  %s1 = inlined_call_operand.vmem [shape: f32[4,64], index: 1, kind: input, shape index: {}]
  %s2 = inlined_call_operand.vmem [shape: f32[64,4], index: 2, kind: input, shape index: {}]
  %s3 = inlined_call_operand.vmem [shape: f32[2,64,1], index: 3, kind: output, shape index: {}]
  %s4 = sld [smem:[#allocation0]]
  $region49: #{tpu_custom_call.1} parent=0
    _
  %s6 = ssub.s32 1, %s4
  %s7 = scalar_select 0, %s6, %s4
  $region1: #{tpu_custom_call.1} parent=0
    #allocation3 [shape = 'u8[131072]{0}', space=vmem, size = 0x20000, scoped, tag = 'input window, operand 0']
    #allocation4 [shape = 's32[2]{0}', space=sflag, size = 0x8, scoped, tag = 'scoped memory for tpu_custom_call.1']
    %8 = vsyncpa [#allocation4], 0
    %s9 = scalar_lea.sflag [#allocation4], 1
    %10 = vsyncpa %s9, 0
    loop: start=0, step=1, limit=4
    $region2: #{tpu_custom_call.1} parent=1 // loop_pre_header
      _
    $region3: #{tpu_custom_call.1} parent=1 // loop_header
      %s12 = sphi 0, %s16
      %p13 = scmp.ge.s32.totalorder %s12, 4
      %s22 = sphi 0, %s24
      %s25 = sphi 0, %s22
      %s26 = sphi 0, %s25
      %s42 = sphi 0, %s26
      %s46 = sphi 0, %s46
      %s48 = sphi 0, %s46
      %s49 = sphi 0, %s48
      %s63 = sphi 0, %s49
      %s67 = sphi 0, %s67
      %s69 = sphi 0, %s67
      %s70 = sphi 0, %s69
      %s84 = sphi 0, %s70
      %s90 = sphi 0, %s92
      %s93 = sphi 0, %s90
      %s94 = sphi 0, %s93
      %s110 = sphi 0, %s94
    $region4: #{tpu_custom_call.1} parent=1 // loop_header_branch
      %15 = sbr.rel (%p13) target = $region8
    $region5: #{tpu_custom_call.1} parent=1 // loop_body
      %s17 = ssub.s32 %s12, 1
      %s18 = ssub.s32 %s12, 2
      %s19 = sadd.s32 %s12, 1
      %s20 = ssub.s32 %s12, %s19
      %p21 = scmp.eq.s32.totalorder %s20, 0
      %s23 = sadd.s32 %s22, 1
      %s24 = scalar_select %p21, %s22, %s23
      %p27 = pneg %p21
      %p28 = scmp.eq.s32.totalorder %s12, 1
      %p29 = por %p27, %p28
      %p30 = scmp.ne.s32.totalorder %s22, %s25
      %p31 = scmp.eq.s32.totalorder %s12, 0
      %p32 = por %p30, %p31
      %p33 = scmp.ne.s32.totalorder %s22, %s25
      %p34 = scmp.eq.s32.totalorder %s17, 1
      %p35 = por %p33, %p34
      %p36 = scmp.ne.s32.totalorder %s25, %s26
      %p37 = scmp.eq.s32.totalorder %s17, 0
      %p38 = por %p36, %p37
      %p39 = scmp.ne.s32.totalorder %s25, %s26
      %p40 = scmp.eq.s32.totalorder %s18, 1
      %p41 = por %p39, %p40
      %p43 = scmp.ne.s32.totalorder %s26, %s42
      %p44 = scmp.eq.s32.totalorder %s18, 0
      %p45 = por %p43, %p44
      %s47 = sadd.s32 %s46, 1
      %p50 = scmp.eq.s32.totalorder %s12, 1
      %p51 = scmp.ne.s32.totalorder %s46, %s48
      %p52 = scmp.eq.s32.totalorder %s12, 0
      %p53 = por %p51, %p52
      %p54 = scmp.ne.s32.totalorder %s46, %s48
      %p55 = scmp.eq.s32.totalorder %s17, 1
      %p56 = por %p54, %p55
      %p57 = scmp.ne.s32.totalorder %s48, %s49
      %p58 = scmp.eq.s32.totalorder %s17, 0
      %p59 = por %p57, %p58
      %p60 = scmp.ne.s32.totalorder %s48, %s49
      %p61 = scmp.eq.s32.totalorder %s18, 1
      %p62 = por %p60, %p61
      %p64 = scmp.ne.s32.totalorder %s49, %s63
      %p65 = scmp.eq.s32.totalorder %s18, 0
      %p66 = por %p64, %p65
      %s68 = sadd.s32 %s67, 1
      %p71 = scmp.eq.s32.totalorder %s12, 1
      %p72 = scmp.ne.s32.totalorder %s67, %s69
      %p73 = scmp.eq.s32.totalorder %s12, 0
      %p74 = por %p72, %p73
      %p75 = scmp.ne.s32.totalorder %s67, %s69
      %p76 = scmp.eq.s32.totalorder %s17, 1
      %p77 = por %p75, %p76
      %p78 = scmp.ne.s32.totalorder %s69, %s70
      %p79 = scmp.eq.s32.totalorder %s17, 0
      %p80 = por %p78, %p79
      %p81 = scmp.ne.s32.totalorder %s69, %s70
      %p82 = scmp.eq.s32.totalorder %s18, 1
      %p83 = por %p81, %p82
      %p85 = scmp.ne.s32.totalorder %s70, %s84
      %p86 = scmp.eq.s32.totalorder %s18, 0
      %p87 = por %p85, %p86
      %s88 = ssub.s32 %s12, %s19
      %p89 = scmp.eq.s32.totalorder %s88, 0
      %s91 = sadd.s32 %s90, 1
      %s92 = scalar_select %p89, %s90, %s91
      %p95 = pneg %p89
      %p96 = scmp.eq.s32.totalorder %s12, 1
      %p97 = por %p95, %p96
      %p98 = scmp.ne.s32.totalorder %s90, %s93
      %p99 = scmp.eq.s32.totalorder %s12, 0
      %p100 = por %p98, %p99
      %p101 = scmp.ne.s32.totalorder %s90, %s93
      %p102 = scmp.eq.s32.totalorder %s17, 1
      %p103 = por %p101, %p102
      %p104 = scmp.ne.s32.totalorder %s93, %s94
      %p105 = scmp.eq.s32.totalorder %s17, 0
      %p106 = por %p104, %p105
      %p107 = scmp.ne.s32.totalorder %s93, %s94
      %p108 = scmp.eq.s32.totalorder %s18, 1
      %p109 = por %p107, %p108
      %p111 = scmp.ne.s32.totalorder %s94, %s110
      %p112 = scmp.eq.s32.totalorder %s18, 0
      %p113 = por %p111, %p112
      %p114 = scmp.le.s32.totalorder 1, %s12
      %p115 = scmp.lt.s32.totalorder %s12, 3
      %p116 = pnand %p114, %p115
      %p117 = pneg %p116
      // Predicated region
      $region9: #{tpu_custom_call.1} parent=5 // pred_check
        _
      $region10: #{tpu_custom_call.1} parent=5 // pred_check_branch
        %119 = sbr.rel (%p116) target = $region12
      $region11: #{tpu_custom_call.1} parent=5 // pred_region
        %s120 = ssub.s32 %s12, 1
        // Predicated region
        $region13: #{tpu_custom_call.1} parent=11 // pred_check
          %p121 = pneg %p59
        $region14: #{tpu_custom_call.1} parent=11 // pred_check_branch
          %123 = sbr.rel (%p121) target = $region16
        $region15: #{tpu_custom_call.1} parent=11 // pred_region
          _
        $region16: #{tpu_custom_call.1} parent=11 // pred_fallthru
          _
        // Predicated region
        $region17: #{tpu_custom_call.1} parent=11 // pred_check
          %p124 = pneg %p80
        $region18: #{tpu_custom_call.1} parent=11 // pred_check_branch
          %126 = sbr.rel (%p124) target = $region20
        $region19: #{tpu_custom_call.1} parent=11 // pred_region
          _
        $region20: #{tpu_custom_call.1} parent=11 // pred_fallthru
          _
      $region12: #{tpu_custom_call.1} parent=5 // pred_fallthru
        _
      %p127 = scmp.lt.s32.totalorder %s12, 2
      // Predicated region
      $region21: #{tpu_custom_call.1} parent=5 // pred_check
        %p128 = pneg %p127
      $region22: #{tpu_custom_call.1} parent=5 // pred_check_branch
        %130 = sbr.rel (%p128) target = $region24
      $region23: #{tpu_custom_call.1} parent=5 // pred_region
        // Predicated region
        $region25: #{tpu_custom_call.1} parent=23 // pred_check
          %p131 = pneg %p32
        $region26: #{tpu_custom_call.1} parent=23 // pred_check_branch
          %133 = sbr.rel (%p131) target = $region28
        $region27: #{tpu_custom_call.1} parent=23 // pred_region
          %s134 = sand.u32 %s22, 1
          %s135 = scalar_lea.sflag [#allocation4], %s134
          %s136 = sand.u32 %s22, 1
          %s137 = smul.addr %s136, 128
          %s138 = scalar_lea.vmem [#allocation3], %s137
          %s140 = ssub.s32 2048, 2048
          %141 = vsyncadd %s135, %s140
          %s142 = smul.addr %s12, 16
          %s143 = smul.addr %s142, 128
          %s144 = scalar_lea.hbm %s0, %s143
          %s145 = sshll.u32 %s138, 4
          %s146 = int_to_ptr.vmem [resolvable:$true] %s145
          %151 = dma.hbm_to_vmem [thread:$0]  %s144, 2048, %s146, %s135, 256, 256, 16
        $region28: #{tpu_custom_call.1} parent=23 // pred_fallthru
          _
      $region24: #{tpu_custom_call.1} parent=5 // pred_fallthru
        _
      %p152 = scmp.le.s32.totalorder 1, %s12
      %p153 = scmp.lt.s32.totalorder %s12, 3
      %p154 = pnand %p152, %p153
      %p155 = pneg %p154
      // Predicated region
      $region29: #{tpu_custom_call.1} parent=5 // pred_check
        _
      $region30: #{tpu_custom_call.1} parent=5 // pred_check_branch
        %157 = sbr.rel (%p154) target = $region32
      $region31: #{tpu_custom_call.1} parent=5 // pred_region
        %s158 = ssub.s32 %s12, 1
        %s159 = sand.u32 %s25, 1
        %s160 = scalar_lea.sflag [#allocation4], %s159
        %s161 = sand.u32 %s25, 1
        %s162 = smul.addr %s161, 128
        %s163 = scalar_lea.vmem [#allocation3], %s162
        // Predicated region
        $region33: #{tpu_custom_call.1} parent=31 // pred_check
          %p164 = pneg %p38
        $region34: #{tpu_custom_call.1} parent=31 // pred_check_branch
          %166 = sbr.rel (%p164) target = $region36
        $region35: #{tpu_custom_call.1} parent=31 // pred_region
          %167 = dma.done %s160, 2048
        $region36: #{tpu_custom_call.1} parent=31 // pred_fallthru
          _
        %s168 = sand.u32 %s25, 1
        %s169 = scalar_lea.sflag [#allocation4], %s168
        %s170 = sand.u32 %s25, 1
        %s171 = smul.addr %s170, 128
        %s172 = scalar_lea.vmem [#allocation3], %s171
        %p173 = pneg %p38
        %p174 = pneg %p35
        %p175 = pneg %p59
        %p176 = pneg %p56
        %p177 = pneg %p80
        %p178 = pneg %p77
        %p179 = pneg %p106
        %p180 = pneg %p103
        %p181 = scmp.lt.s32.totalorder %s17, 1
        %s182 = scalar_select %p181, %s17, 1
        %s183 = smul.addr %s182, 8
        %s184 = smul.addr %s183, 8
        %s185 = scalar_lea.vmem %s3, %s184
        %p186 = scmp.lt.s32.totalorder %s17, 1
        %s187 = scalar_select %p186, %s17, 1
        %s188 = smul.addr %s187, 8
        %s189 = smul.addr %s188, 8
        %s190 = scalar_lea.vmem %s3, %s189
        %v191 = vld [vmem:[%s163] sm:$0xff]
        %v192 = vld [vmem:[%s163 + $0x8] sm:$0xff]
        %v193 = vld [vmem:[%s163 + $0x10] sm:$0xff]
        %v194 = vld [vmem:[%s163 + $0x18] sm:$0xff]
        %v195 = vld [vmem:[%s163 + $0x20] sm:$0xff]
        %v196 = vld [vmem:[%s163 + $0x28] sm:$0xff]
        %v197 = vld [vmem:[%s163 + $0x30] sm:$0xff]
        %v198 = vld [vmem:[%s163 + $0x38] sm:$0xff]
        %v199 = vld [vmem:[%s163 + $0x40] sm:$0xff]
        %v200 = vld [vmem:[%s163 + $0x48] sm:$0xff]
        %v201 = vld [vmem:[%s163 + $0x50] sm:$0xff]
        %v202 = vld [vmem:[%s163 + $0x58] sm:$0xff]
        %v203 = vld [vmem:[%s163 + $0x60] sm:$0xff]
        %v204 = vld [vmem:[%s163 + $0x68] sm:$0xff]
        %v205 = vld [vmem:[%s163 + $0x70] sm:$0xff]
        %v206 = vld [vmem:[%s163 + $0x78] sm:$0xff]
        %v207 = vadd.f32 %v191, %v192
        %208 = vadd.xlane.f32.xlu0 %v207
        %v209 = vpop.xlane.xlu0 %208
        %v210 = vadd.f32 %v193, %v194
        %211 = vadd.xlane.f32.xlu0 %v210
        %v212 = vpop.xlane.xlu0 %211
        %v213 = vadd.f32 %v195, %v196
        %214 = vadd.xlane.f32.xlu0 %v213
        %v215 = vpop.xlane.xlu0 %214
        %v216 = vadd.f32 %v197, %v198
        %217 = vadd.xlane.f32.xlu0 %v216
        %v218 = vpop.xlane.xlu0 %217
        %v219 = vadd.f32 %v199, %v200
        %220 = vadd.xlane.f32.xlu0 %v219
        %v221 = vpop.xlane.xlu0 %220
        %v222 = vadd.f32 %v201, %v202
        %223 = vadd.xlane.f32.xlu0 %v222
        %v224 = vpop.xlane.xlu0 %223
        %v225 = vadd.f32 %v203, %v204
        %226 = vadd.xlane.f32.xlu0 %v225
        %v227 = vpop.xlane.xlu0 %226
        %v228 = vadd.f32 %v205, %v206
        %229 = vadd.xlane.f32.xlu0 %v228
        %v230 = vpop.xlane.xlu0 %229
        %v231 = vmul.f32 %v209, 0.00390625
        %v232 = vmul.f32 %v212, 0.00390625
        %v233 = vmul.f32 %v215, 0.00390625
        %v234 = vmul.f32 %v218, 0.00390625
        %v235 = vmul.f32 %v221, 0.00390625
        %v236 = vmul.f32 %v224, 0.00390625
        %v237 = vmul.f32 %v227, 0.00390625
        %v238 = vmul.f32 %v230, 0.00390625
        %vm239 = vcmask 7168
        %240 = vst.msk [vmem:[#allocation2] sm:$0xff] %vm239, %v231
        %241 = vst.msk [vmem:[#allocation2 + $0x8] sm:$0xff] %vm239, %v232
        %242 = vst.msk [vmem:[#allocation2 + $0x10] sm:$0xff] %vm239, %v233
        %243 = vst.msk [vmem:[#allocation2 + $0x18] sm:$0xff] %vm239, %v234
        %244 = vst.msk [vmem:[#allocation2 + $0x20] sm:$0xff] %vm239, %v235
        %245 = vst.msk [vmem:[#allocation2 + $0x28] sm:$0xff] %vm239, %v236
        %246 = vst.msk [vmem:[#allocation2 + $0x30] sm:$0xff] %vm239, %v237
        %247 = vst.msk [vmem:[#allocation2 + $0x38] sm:$0xff] %vm239, %v238
        %v248 = vmax.f32 %v191, %v192
        %249 = vmax.xlane.f32.xlu0 %v248
        %v250 = vpop.xlane.xlu0 %249
        %v251 = vmax.f32 %v193, %v194
        %252 = vmax.xlane.f32.xlu0 %v251
        %v253 = vpop.xlane.xlu0 %252
        %v254 = vmax.f32 %v195, %v196
        %255 = vmax.xlane.f32.xlu0 %v254
        %v256 = vpop.xlane.xlu0 %255
        %v257 = vmax.f32 %v197, %v198
        %258 = vmax.xlane.f32.xlu0 %v257
        %v259 = vpop.xlane.xlu0 %258
        %v260 = vmax.f32 %v199, %v200
        %261 = vmax.xlane.f32.xlu0 %v260
        %v262 = vpop.xlane.xlu0 %261
        %v263 = vmax.f32 %v201, %v202
        %264 = vmax.xlane.f32.xlu0 %v263
        %v265 = vpop.xlane.xlu0 %264
        %v266 = vmax.f32 %v203, %v204
        %267 = vmax.xlane.f32.xlu0 %v266
        %v268 = vpop.xlane.xlu0 %267
        %v269 = vmax.f32 %v205, %v206
        %270 = vmax.xlane.f32.xlu0 %v269
        %v271 = vpop.xlane.xlu0 %270
        %vm272 = vcmask 15368
        %273 = vst.msk [vmem:[#allocation2] sm:$0xff] %vm272, %v250
        %274 = vst.msk [vmem:[#allocation2 + $0x8] sm:$0xff] %vm272, %v253
        %275 = vst.msk [vmem:[#allocation2 + $0x10] sm:$0xff] %vm272, %v256
        %276 = vst.msk [vmem:[#allocation2 + $0x18] sm:$0xff] %vm272, %v259
        %277 = vst.msk [vmem:[#allocation2 + $0x20] sm:$0xff] %vm272, %v262
        %278 = vst.msk [vmem:[#allocation2 + $0x28] sm:$0xff] %vm272, %v265
        %279 = vst.msk [vmem:[#allocation2 + $0x30] sm:$0xff] %vm272, %v268
        %280 = vst.msk [vmem:[#allocation2 + $0x38] sm:$0xff] %vm272, %v271
        %v281 = vld [vmem:[#allocation2] sm:$0xff]
        %v282 = vld [vmem:[#allocation2 + $0x8] sm:$0xff]
        %v283 = vld [vmem:[#allocation2 + $0x10] sm:$0xff]
        %v284 = vld [vmem:[#allocation2 + $0x18] sm:$0xff]
        %v285 = vld [vmem:[#allocation2 + $0x20] sm:$0xff]
        %v286 = vld [vmem:[#allocation2 + $0x28] sm:$0xff]
        %v287 = vld [vmem:[#allocation2 + $0x30] sm:$0xff]
        %v288 = vld [vmem:[#allocation2 + $0x38] sm:$0xff]
        %v289 = vld [vmem:[%s1] sm:$0xf]
        %v290 = vld [vmem:[%s2] sm:$0xff]
        %v291 = vld [vmem:[%s2 + $0x8] sm:$0xff]
        %v292 = vld [vmem:[%s2 + $0x10] sm:$0xff]
        %v293 = vld [vmem:[%s2 + $0x18] sm:$0xff]
        %v294 = vld [vmem:[%s2 + $0x20] sm:$0xff]
        %v295 = vld [vmem:[%s2 + $0x28] sm:$0xff]
        %v296 = vld [vmem:[%s2 + $0x30] sm:$0xff]
        %v297 = vld [vmem:[%s2 + $0x38] sm:$0xff]
        %vm298 = vcmask 523264
        %v300 = vsel %vm298, %v289, 0
        %302 = vmatprep.subr.mxu0 0.0
        %303 = vmatpush1.msra.mxu0 %v281
        %304 = vmatprep.subr.mxu0 0.0
        %305 = vmatpush1.msra.mxu0 %v282
        %306 = vmatprep.subr.mxu0 0.0
        %307 = vmatpush1.msra.mxu0 %v283
        %308 = vmatprep.subr.mxu0 0.0
        %309 = vmatpush1.msra.mxu0 %v284
        %310 = vmatprep.subr.mxu0 0.0
        %311 = vmatpush1.msra.mxu0 %v285
        %312 = vmatprep.subr.mxu0 0.0
        %313 = vmatpush1.msra.mxu0 %v286
        %314 = vmatprep.subr.mxu0 0.0
        %315 = vmatpush1.msra.mxu0 %v287
        %316 = vmatprep.subr.mxu0 0.0
        %317 = vmatpush1.msra.mxu0 %v288
        %318 = vmatprep.subr.mxu0 0.0
        %319 = vmatpush1.msra.mxu0 0.0
        %320 = vmatprep.subr.mxu0 0.0
        %321 = vmatpush1.msra.mxu0 0.0
        %322 = vmatprep.subr.mxu0 0.0
        %323 = vmatpush1.msra.mxu0 0.0
        %324 = vmatprep.subr.mxu0 0.0
        %325 = vmatpush1.msra.mxu0 0.0
        %326 = vmatprep.subr.mxu0 0.0
        %327 = vmatpush1.msra.mxu0 0.0
        %328 = vmatprep.subr.mxu0 0.0
        %329 = vmatpush1.msra.mxu0 0.0
        %330 = vmatprep.subr.mxu0 0.0
        %331 = vmatpush1.msra.mxu0 0.0
        %332 = vmatprep.subr.mxu0 0.0
        %333 = vmatpush1.msra.mxu0 0.0
        %334 = vmatprep.subr.mxu0 0.0
        %335 = vmatpush1.msra.mxu0 0.0
        %336 = vmatprep.subr.mxu0 0.0
        %337 = vmatpush1.msra.mxu0 0.0
        %338 = vmatprep.subr.mxu0 0.0
        %339 = vmatpush1.msra.mxu0 0.0
        %340 = vmatprep.subr.mxu0 0.0
        %341 = vmatpush1.msra.mxu0 0.0
        %342 = vmatprep.subr.mxu0 0.0
        %343 = vmatpush1.msra.mxu0 0.0
        %344 = vmatprep.subr.mxu0 0.0
        %345 = vmatpush1.msra.mxu0 0.0
        %346 = vmatprep.subr.mxu0 0.0
        %347 = vmatpush1.msra.mxu0 0.0
        %348 = vmatprep.subr.mxu0 0.0
        %349 = vmatpush1.msra.mxu0 0.0
        %350 = vmatprep.subr.mxu0 0.0
        %351 = vmatpush1.msra.mxu0 0.0
        %352 = vmatprep.subr.mxu0 0.0
        %353 = vmatpush1.msra.mxu0 0.0
        %354 = vmatprep.subr.mxu0 0.0
        %355 = vmatpush1.msra.mxu0 0.0
        %356 = vmatprep.subr.mxu0 0.0
        %357 = vmatpush1.msra.mxu0 0.0
        %358 = vmatprep.subr.mxu0 0.0
        %359 = vmatpush1.msra.mxu0 0.0
        %360 = vmatprep.subr.mxu0 0.0
        %361 = vmatpush1.msra.mxu0 0.0
        %362 = vmatprep.subr.mxu0 0.0
        %363 = vmatpush1.msra.mxu0 0.0
        %364 = vmatprep.subr.mxu0 0.0
        %365 = vmatpush1.msra.mxu0 0.0
        %366 = vmatprep.mubr.f32.mxu0 0.0
        %367 = vmatmul.mubr.f32.gmra.mrb[0].mxu0 %v300
        %v368 = vpop.f32.mrb[0].mxu0
        %v369 = vadd.f32 0.0, %v368
        %v370 = vpop.f32.mrb[0].mxu0
        %371 = vdwg.mxu0
        %v372 = vmax.f32 %v369, 0.0
        %vm373 = vcmask 31744
        %v375 = vsel %vm373, %v290, 0
        %v378 = vsel %vm373, %v291, 0
        %v381 = vsel %vm373, %v292, 0
        %v384 = vsel %vm373, %v293, 0
        %v387 = vsel %vm373, %v294, 0
        %v390 = vsel %vm373, %v295, 0
        %v393 = vsel %vm373, %v296, 0
        %v396 = vsel %vm373, %v297, 0
        %vm398 = vcmask 1043456
        %v400 = vsel %vm398, %v372, 0
        %402 = vmatprep.subr.mxu0 0.0
        %403 = vmatpush1.msra.mxu0 %v400
        %404 = vmatprep.subr.mxu0 0.0
        %405 = vmatpush1.msra.mxu0 0.0
        %406 = vmatprep.subr.mxu0 0.0
        %407 = vmatpush1.msra.mxu0 0.0
        %408 = vmatprep.subr.mxu0 0.0
        %409 = vmatpush1.msra.mxu0 0.0
        %410 = vmatprep.subr.mxu0 0.0
        %411 = vmatpush1.msra.mxu0 0.0
        %412 = vmatprep.subr.mxu0 0.0
        %413 = vmatpush1.msra.mxu0 0.0
        %414 = vmatprep.subr.mxu0 0.0
        %415 = vmatpush1.msra.mxu0 0.0
        %416 = vmatprep.subr.mxu0 0.0
        %417 = vmatpush1.msra.mxu0 0.0
        %418 = vmatprep.subr.mxu0 0.0
        %419 = vmatpush1.msra.mxu0 0.0
        %420 = vmatprep.subr.mxu0 0.0
        %421 = vmatpush1.msra.mxu0 0.0
        %422 = vmatprep.subr.mxu0 0.0
        %423 = vmatpush1.msra.mxu0 0.0
        %424 = vmatprep.subr.mxu0 0.0
        %425 = vmatpush1.msra.mxu0 0.0
        %426 = vmatprep.subr.mxu0 0.0
        %427 = vmatpush1.msra.mxu0 0.0
        %428 = vmatprep.subr.mxu0 0.0
        %429 = vmatpush1.msra.mxu0 0.0
        %430 = vmatprep.subr.mxu0 0.0
        %431 = vmatpush1.msra.mxu0 0.0
        %432 = vmatprep.subr.mxu0 0.0
        %433 = vmatpush1.msra.mxu0 0.0
        %434 = vmatprep.subr.mxu0 0.0
        %435 = vmatpush1.msra.mxu0 0.0
        %436 = vmatprep.subr.mxu0 0.0
        %437 = vmatpush1.msra.mxu0 0.0
        %438 = vmatprep.subr.mxu0 0.0
        %439 = vmatpush1.msra.mxu0 0.0
        %440 = vmatprep.subr.mxu0 0.0
        %441 = vmatpush1.msra.mxu0 0.0
        %442 = vmatprep.subr.mxu0 0.0
        %443 = vmatpush1.msra.mxu0 0.0
        %444 = vmatprep.subr.mxu0 0.0
        %445 = vmatpush1.msra.mxu0 0.0
        %446 = vmatprep.subr.mxu0 0.0
        %447 = vmatpush1.msra.mxu0 0.0
        %448 = vmatprep.subr.mxu0 0.0
        %449 = vmatpush1.msra.mxu0 0.0
        %450 = vmatprep.subr.mxu0 0.0
        %451 = vmatpush1.msra.mxu0 0.0
        %452 = vmatprep.subr.mxu0 0.0
        %453 = vmatpush1.msra.mxu0 0.0
        %454 = vmatprep.subr.mxu0 0.0
        %455 = vmatpush1.msra.mxu0 0.0
        %456 = vmatprep.subr.mxu0 0.0
        %457 = vmatpush1.msra.mxu0 0.0
        %458 = vmatprep.subr.mxu0 0.0
        %459 = vmatpush1.msra.mxu0 0.0
        %460 = vmatprep.subr.mxu0 0.0
        %461 = vmatpush1.msra.mxu0 0.0
        %462 = vmatprep.subr.mxu0 0.0
        %463 = vmatpush1.msra.mxu0 0.0
        %464 = vmatprep.subr.mxu0 0.0
        %465 = vmatpush1.msra.mxu0 0.0
        %466 = vmatprep.mubr.f32.mxu0 0.0
        %467 = vmatmul.mubr.f32.gmra.mrb[0].mxu0 %v375
        %v468 = vpop.f32.mrb[0].mxu0
        %v469 = vadd.f32 0.0, %v468
        %v470 = vpop.f32.mrb[0].mxu0
        %471 = vmatprep.mubr.f32.mxu0 0.0
        %472 = vmatmul.mubr.f32.gmra.mrb[0].mxu0 %v378
        %v473 = vpop.f32.mrb[0].mxu0
        %v474 = vadd.f32 0.0, %v473
        %v475 = vpop.f32.mrb[0].mxu0
        %476 = vmatprep.mubr.f32.mxu0 0.0
        %477 = vmatmul.mubr.f32.gmra.mrb[0].mxu0 %v381
        %v478 = vpop.f32.mrb[0].mxu0
        %v479 = vadd.f32 0.0, %v478
        %v480 = vpop.f32.mrb[0].mxu0
        %481 = vmatprep.mubr.f32.mxu0 0.0
        %482 = vmatmul.mubr.f32.gmra.mrb[0].mxu0 %v384
        %v483 = vpop.f32.mrb[0].mxu0
        %v484 = vadd.f32 0.0, %v483
        %v485 = vpop.f32.mrb[0].mxu0
        %486 = vmatprep.mubr.f32.mxu0 0.0
        %487 = vmatmul.mubr.f32.gmra.mrb[0].mxu0 %v387
        %v488 = vpop.f32.mrb[0].mxu0
        %v489 = vadd.f32 0.0, %v488
        %v490 = vpop.f32.mrb[0].mxu0
        %491 = vmatprep.mubr.f32.mxu0 0.0
        %492 = vmatmul.mubr.f32.gmra.mrb[0].mxu0 %v390
        %v493 = vpop.f32.mrb[0].mxu0
        %v494 = vadd.f32 0.0, %v493
        %v495 = vpop.f32.mrb[0].mxu0
        %496 = vmatprep.mubr.f32.mxu0 0.0
        %497 = vmatmul.mubr.f32.gmra.mrb[0].mxu0 %v393
        %v498 = vpop.f32.mrb[0].mxu0
        %v499 = vadd.f32 0.0, %v498
        %v500 = vpop.f32.mrb[0].mxu0
        %501 = vmatprep.mubr.f32.mxu0 0.0
        %502 = vmatmul.mubr.f32.gmra.mrb[0].mxu0 %v396
        %v503 = vpop.f32.mrb[0].mxu0
        %v504 = vadd.f32 0.0, %v503
        %v505 = vpop.f32.mrb[0].mxu0
        %506 = vdwg.mxu0
        %515 = vrot.lane.b32.xlu0 %v469, 127
        %v516 = vpop.permute.xlu0 %515
        %517 = vrot.lane.b32.xlu0 %v474, 127
        %v518 = vpop.permute.xlu0 %517
        %519 = vrot.lane.b32.xlu0 %v479, 127
        %v520 = vpop.permute.xlu0 %519
        %521 = vrot.lane.b32.xlu0 %v484, 127
        %v522 = vpop.permute.xlu0 %521
        %523 = vrot.lane.b32.xlu0 %v489, 127
        %v524 = vpop.permute.xlu0 %523
        %525 = vrot.lane.b32.xlu0 %v494, 127
        %v526 = vpop.permute.xlu0 %525
        %527 = vrot.lane.b32.xlu0 %v499, 127
        %v528 = vpop.permute.xlu0 %527
        %529 = vrot.lane.b32.xlu0 %v504, 127
        %v530 = vpop.permute.xlu0 %529
        %v539 = vadd.f32 %v469, %v516
        %v540 = vadd.f32 %v474, %v518
        %v541 = vadd.f32 %v479, %v520
        %v542 = vadd.f32 %v484, %v522
        %v543 = vadd.f32 %v489, %v524
        %v544 = vadd.f32 %v494, %v526
        %v545 = vadd.f32 %v499, %v528
        %v546 = vadd.f32 %v504, %v530
        %v547 = vxor.u32 %v539, 2147483648
        %v548 = vxor.u32 %v540, 2147483648
        %v549 = vxor.u32 %v541, 2147483648
        %v550 = vxor.u32 %v542, 2147483648
        %v551 = vxor.u32 %v543, 2147483648
        %v552 = vxor.u32 %v544, 2147483648
        %v553 = vxor.u32 %v545, 2147483648
        %v554 = vxor.u32 %v546, 2147483648
        %v555 = vmul.f32 %v547, 1.442695
        %v556 = vpow.pop %v555
        %v557 = vmul.f32 %v548, 1.442695
        %v558 = vpow.pop %v557
        %v559 = vmul.f32 %v549, 1.442695
        %v560 = vpow.pop %v559
        %v561 = vmul.f32 %v550, 1.442695
        %v562 = vpow.pop %v561
        %v563 = vmul.f32 %v551, 1.442695
        %v564 = vpow.pop %v563
        %v565 = vmul.f32 %v552, 1.442695
        %v566 = vpow.pop %v565
        %v567 = vmul.f32 %v553, 1.442695
        %v568 = vpow.pop %v567
        %v569 = vmul.f32 %v554, 1.442695
        %v570 = vpow.pop %v569
        %v571 = vadd.f32 %v556, 1.0
        %v572 = vadd.f32 %v558, 1.0
        %v573 = vadd.f32 %v560, 1.0
        %v574 = vadd.f32 %v562, 1.0
        %v575 = vadd.f32 %v564, 1.0
        %v576 = vadd.f32 %v566, 1.0
        %v577 = vadd.f32 %v568, 1.0
        %v578 = vadd.f32 %v570, 1.0
        %v579 = vrcp.pop %v571
        %v580 = vmul.f32 1.0, %v579
        %v581 = vrcp.pop %v572
        %v582 = vmul.f32 1.0, %v581
        %v583 = vrcp.pop %v573
        %v584 = vmul.f32 1.0, %v583
        %v585 = vrcp.pop %v574
        %v586 = vmul.f32 1.0, %v585
        %v587 = vrcp.pop %v575
        %v588 = vmul.f32 1.0, %v587
        %v589 = vrcp.pop %v576
        %v590 = vmul.f32 1.0, %v589
        %v591 = vrcp.pop %v577
        %v592 = vmul.f32 1.0, %v591
        %v593 = vrcp.pop %v578
        %v594 = vmul.f32 1.0, %v593
        %595 = vst.msk [vmem:[%s190] sm:$0xff] %vm239, %v580
        %596 = vst.msk [vmem:[%s190 + $0x8] sm:$0xff] %vm239, %v582
        %597 = vst.msk [vmem:[%s190 + $0x10] sm:$0xff] %vm239, %v584
        %598 = vst.msk [vmem:[%s190 + $0x18] sm:$0xff] %vm239, %v586
        %599 = vst.msk [vmem:[%s190 + $0x20] sm:$0xff] %vm239, %v588
        %600 = vst.msk [vmem:[%s190 + $0x28] sm:$0xff] %vm239, %v590
        %601 = vst.msk [vmem:[%s190 + $0x30] sm:$0xff] %vm239, %v592
        %602 = vst.msk [vmem:[%s190 + $0x38] sm:$0xff] %vm239, %v594
        %p603 = scmp.lt.s32.totalorder %s17, 1
        %s604 = scalar_select %p603, %s17, 1
        %s605 = smul.addr %s604, 8
        %s606 = smul.addr %s605, 8
        %s607 = scalar_lea.vmem %s3, %s606
        // Predicated region
        $region37: #{tpu_custom_call.1} parent=31 // pred_check
          %p608 = pneg %p103
        $region38: #{tpu_custom_call.1} parent=31 // pred_check_branch
          %610 = sbr.rel (%p608) target = $region40
        $region39: #{tpu_custom_call.1} parent=31 // pred_region
          _
        $region40: #{tpu_custom_call.1} parent=31 // pred_fallthru
          _
      $region32: #{tpu_custom_call.1} parent=5 // pred_fallthru
        _
      %p611 = scmp.le.s32.totalorder 2, %s12
      // Predicated region
      $region41: #{tpu_custom_call.1} parent=5 // pred_check
        %p612 = pneg %p611
      $region42: #{tpu_custom_call.1} parent=5 // pred_check_branch
        %614 = sbr.rel (%p612) target = $region44
      $region43: #{tpu_custom_call.1} parent=5 // pred_region
        %s615 = ssub.s32 %s12, 2
        // Predicated region
        $region45: #{tpu_custom_call.1} parent=43 // pred_check
          %p616 = pneg %p109
        $region46: #{tpu_custom_call.1} parent=43 // pred_check_branch
          %618 = sbr.rel (%p616) target = $region48
        $region47: #{tpu_custom_call.1} parent=43 // pred_region
          %p619 = scmp.lt.s32.totalorder %s18, 1
          %s620 = scalar_select %p619, %s18, 1
          %s621 = smul.addr %s620, 8
          %s622 = smul.addr %s621, 8
          %s623 = scalar_lea.vmem %s3, %s622
        $region48: #{tpu_custom_call.1} parent=43 // pred_fallthru
          _
      $region44: #{tpu_custom_call.1} parent=5 // pred_fallthru
        _
    $region6: #{tpu_custom_call.1} parent=1 // loop_footer
      %s16 = sadd.s32 1, %s12
    $region7: #{tpu_custom_call.1} parent=1 // loop_footer_branch
      %11 = sbr.rel target = $region3
    $region8: #{tpu_custom_call.1} parent=1 // loop_exit
      _
    %624 = vsyncpa [#allocation4], 1
    %s625 = scalar_lea.sflag [#allocation4], 1
    %626 = vsyncpa %s625, 1

</llo_original>
